<compile_context>
chip_gen: v5e
topology: v5e:2x2
jax: 0.10.0
libtpu: 0.0.40
codegen_flags: <defaults>
</compile_context>

<pallas_src>
import jax
import jax.numpy as jnp
from jax.experimental import pallas as pl
from jax.experimental.pallas import tpu as pltpu

_LANE = 128      # vreg lane width; last-dim alignment target
_SUBLANE = 8     # f32 sublane height; batch-tile alignment target


def _round_up(n, m):
    return ((n + m - 1) // m) * m


# ---------------------------------------------------------------------------
# Pallas kernel: fused (Linear + ReLU)* ... + final Linear; the whole hidden
# path for one batch tile stays in VMEM / vregs.
# ---------------------------------------------------------------------------
def _make_fused_mlp_kernel(n_blocks):
    def kernel(*refs):
        x_ref = refs[0]
        out_ref = refs[-1]
        param_refs = refs[1:-1]

        h = x_ref[...]                       # already f32, lane-padded
        idx = 0
        for _ in range(n_blocks):
            w1, b1, w2, b2 = param_refs[idx:idx + 4]
            idx += 4
            h = jnp.dot(h, w1[...], preferred_element_type=jnp.float32) + b1[...]
            h = jnp.maximum(h, 0.0)
            h = jnp.dot(h, w2[...], preferred_element_type=jnp.float32) + b2[...]
            h = jnp.maximum(h, 0.0)
        wc, bc = param_refs[idx], param_refs[idx + 1]
        out_ref[...] = (
            jnp.dot(h, wc[...], preferred_element_type=jnp.float32) + bc[...]
        ).astype(out_ref.dtype)

    return kernel


# ---------------------------------------------------------------------------
# Lane-pad parameters: W -> [round_up(in,128), round_up(out,128)],
# b -> [1, round_up(out,128)], zero-filled so the padded lanes carry exact 0s
# through ReLU and never pollute the logical columns.
# ---------------------------------------------------------------------------
def _pad_params(params):
    padded = []
    for i in range(0, len(params), 2):
        w, b = params[i], params[i + 1]
        in_d, out_d = w.shape
        in_p = _round_up(in_d, _LANE)
        out_p = _round_up(out_d, _LANE)
        w_p = jnp.zeros((in_p, out_p), w.dtype).at[:in_d, :out_d].set(w)
        b_p = jnp.zeros((1, out_p), b.dtype).at[:, :out_d].set(b.reshape(1, -1))
        padded += [w_p, b_p]
    return padded


def vgg_forward_pallas(x, params, num_classes, *, tile_b=None):
    """x: [B, input_dim] float32. params: flat list [W1,b1,W2,b2,...,Wc,bc]
    in logical (unpadded) shapes. Returns [B, num_classes] float32."""
    B, D = x.shape
    n_blocks = (len(params) - 2) // 4

    padded_params = _pad_params(params)
    D_pad = padded_params[0].shape[0]
    C_pad = padded_params[-2].shape[1]

    # Batch tile: whole (sublane-aligned) batch in one grid step for small B,
    # capped at 256 rows (one v6e/v7x MXU pass, 2x a v5e pass) for large B.
    if tile_b is None:
        tile_b = min(_round_up(B, _SUBLANE), 256)
    tile_b = _round_up(tile_b, _SUBLANE)
    B_pad = _round_up(B, tile_b)

    # Zero-pad input: extra feature lanes hit zero weight rows; extra batch
    # rows just produce discarded output rows.
    x_pad = jnp.zeros((B_pad, D_pad), jnp.float32).at[:B, :D].set(
        x.astype(jnp.float32))

    kernel = _make_fused_mlp_kernel(n_blocks)

    # x / out tiled over batch; parameters fully resident (constant block).
    in_specs = [pl.BlockSpec((tile_b, D_pad), lambda i: (i, 0))]
    for p in padded_params:
        in_specs.append(pl.BlockSpec(p.shape, lambda i: (0, 0)))
    out_spec = pl.BlockSpec((tile_b, C_pad), lambda i: (i, 0))

    # Accurate cost hint for XLA's scheduler.
    flops = 0
    bytes_accessed = x_pad.size * 4 + B_pad * C_pad * 4
    for i in range(0, len(padded_params), 2):
        w = padded_params[i]
        flops += 2 * B_pad * w.shape[0] * w.shape[1]
        bytes_accessed += (w.size + padded_params[i + 1].size) * 4

    out_pad = pl.pallas_call(
        kernel,
        out_shape=jax.ShapeDtypeStruct((B_pad, C_pad), jnp.float32),
        grid_spec=pltpu.PrefetchScalarGridSpec(
            num_scalar_prefetch=0,
            grid=(B_pad // tile_b,),
            in_specs=in_specs,
            out_specs=out_spec,
        ),
        compiler_params=pltpu.CompilerParams(
            dimension_semantics=("parallel",),
        ),
        cost_estimate=pl.CostEstimate(
            flops=flops, transcendentals=0, bytes_accessed=bytes_accessed),
    )(x_pad, *padded_params)

    return out_pad[:B, :num_classes]


# ---------------------------------------------------------------------------
# Parameter construction mirroring VGG.__init__/_make_layers (logical shapes).
# ---------------------------------------------------------------------------
def init_vgg_params(key, input_dim, config, num_classes=2):
    params = []
    in_channels = input_dim
    for v in config:
        if v == 'M':          # skipped, exactly as in _make_layers
            continue
        # vgg_block(in_channels, v, v): Linear(in,v)+ReLU, Linear(v,v)+ReLU
        key, k1, k2 = jax.random.split(key, 3)
        params.append(jax.random.normal(k1, (in_channels, v), jnp.float32)
                      * (1.0 / jnp.sqrt(in_channels)))
        params.append(jnp.zeros((1, v), jnp.float32))
        params.append(jax.random.normal(k2, (v, v), jnp.float32)
                      * (1.0 / jnp.sqrt(v)))
        params.append(jnp.zeros((1, v), jnp.float32))
        in_channels = v
    last_channel = max(v for v in config if v != 'M')
    assert in_channels == last_channel, "flatten must match classifier in-dim"
    key, kc = jax.random.split(key)
    params.append(jax.random.normal(kc, (last_channel, num_classes), jnp.float32)
                  * (1.0 / jnp.sqrt(last_channel)))
    params.append(jnp.zeros((1, num_classes), jnp.float32))
    return params


def vgg_forward_ref(x, params):
    """Pure-JAX reference of the same forward pass (for correctness check)."""
    n_blocks = (len(params) - 2) // 4
    h = x
    idx = 0
    for _ in range(n_blocks):
        w1, b1, w2, b2 = params[idx:idx + 4]
        idx += 4
        h = jnp.maximum(h @ w1 + b1, 0.0)
        h = jnp.maximum(h @ w2 + b2, 0.0)
    wc, bc = params[idx], params[idx + 1]
    return h @ wc + bc


if __name__ == "__main__":
    key = jax.random.PRNGKey(0)
    kx, kp = jax.random.split(key)

    # Small synthetic shapes consistent with the tabular forward pass.
    batch = 16
    input_dim = 16                      # stand-in for X_train.shape[1]
    config = [32, 64, 'M', 64]          # 'M' entries are skipped by _make_layers
    num_classes = 2

    x = jax.random.normal(kx, (batch, input_dim), jnp.float32)
    params = init_vgg_params(kp, input_dim, config, num_classes)

    out = vgg_forward_pallas(x, params, num_classes)   # grid=(1,) for this B
    out = jax.block_until_ready(out)

    ref = vgg_forward_ref(x, params)
    assert out.shape == (batch, num_classes)
    assert jnp.allclose(out, ref, atol=1e-4, rtol=1e-4), "mismatch vs reference"

    print("KERNEL_OK")
</pallas_src>

<mosaic_0001>
module attributes {stable_mosaic.version = 11 : i64} {
  func.func @kernel(%arg0: i32, %arg1: memref<16x128xf32, #tpu.memory_space<vmem>>, %arg2: memref<128x128xf32, #tpu.memory_space<vmem>>, %arg3: memref<1x128xf32, #tpu.memory_space<vmem>>, %arg4: memref<128x128xf32, #tpu.memory_space<vmem>>, %arg5: memref<1x128xf32, #tpu.memory_space<vmem>>, %arg6: memref<128x128xf32, #tpu.memory_space<vmem>>, %arg7: memref<1x128xf32, #tpu.memory_space<vmem>>, %arg8: memref<128x128xf32, #tpu.memory_space<vmem>>, %arg9: memref<1x128xf32, #tpu.memory_space<vmem>>, %arg10: memref<128x128xf32, #tpu.memory_space<vmem>>, %arg11: memref<1x128xf32, #tpu.memory_space<vmem>>, %arg12: memref<128x128xf32, #tpu.memory_space<vmem>>, %arg13: memref<1x128xf32, #tpu.memory_space<vmem>>, %arg14: memref<128x128xf32, #tpu.memory_space<vmem>>, %arg15: memref<1x128xf32, #tpu.memory_space<vmem>>, %arg16: memref<16x128xf32, #tpu.memory_space<vmem>>) attributes {dimension_semantics = [#tpu.dimension_semantics<parallel>], iteration_bounds = array<i64: 1>, scalar_prefetch = 0 : i64, scratch_operands = 0 : i64, tpu.core_type = #tpu.core_type<tc>, window_params = [{transform_indices = @transform_0, window_bounds = array<i64: 16, 128>}, {pipeline_mode = #tpu.pipeline_mode<synchronous>, transform_indices = @transform_1, window_bounds = array<i64: 128, 128>}, {pipeline_mode = #tpu.pipeline_mode<synchronous>, transform_indices = @transform_2, window_bounds = array<i64: 1, 128>}, {pipeline_mode = #tpu.pipeline_mode<synchronous>, transform_indices = @transform_3, window_bounds = array<i64: 128, 128>}, {pipeline_mode = #tpu.pipeline_mode<synchronous>, transform_indices = @transform_4, window_bounds = array<i64: 1, 128>}, {pipeline_mode = #tpu.pipeline_mode<synchronous>, transform_indices = @transform_5, window_bounds = array<i64: 128, 128>}, {pipeline_mode = #tpu.pipeline_mode<synchronous>, transform_indices = @transform_6, window_bounds = array<i64: 1, 128>}, {pipeline_mode = #tpu.pipeline_mode<synchronous>, transform_indices = @transform_7, window_bounds = array<i64: 128, 128>}, {pipeline_mode = #tpu.pipeline_mode<synchronous>, transform_indices = @transform_8, window_bounds = array<i64: 1, 128>}, {pipeline_mode = #tpu.pipeline_mode<synchronous>, transform_indices = @transform_9, window_bounds = array<i64: 128, 128>}, {pipeline_mode = #tpu.pipeline_mode<synchronous>, transform_indices = @transform_10, window_bounds = array<i64: 1, 128>}, {pipeline_mode = #tpu.pipeline_mode<synchronous>, transform_indices = @transform_11, window_bounds = array<i64: 128, 128>}, {pipeline_mode = #tpu.pipeline_mode<synchronous>, transform_indices = @transform_12, window_bounds = array<i64: 1, 128>}, {pipeline_mode = #tpu.pipeline_mode<synchronous>, transform_indices = @transform_13, window_bounds = array<i64: 128, 128>}, {pipeline_mode = #tpu.pipeline_mode<synchronous>, transform_indices = @transform_14, window_bounds = array<i64: 1, 128>}, {transform_indices = @transform_15, window_bounds = array<i64: 16, 128>}]} {
    %c0 = arith.constant 0 : index
    %c0_0 = arith.constant 0 : index
    %0 = vector.load %arg1[%c0, %c0_0] : memref<16x128xf32, #tpu.memory_space<vmem>>, vector<16x128xf32>
    %c0_1 = arith.constant 0 : index
    %c0_2 = arith.constant 0 : index
    %1 = vector.load %arg2[%c0_1, %c0_2] : memref<128x128xf32, #tpu.memory_space<vmem>>, vector<128x128xf32>
    %cst = arith.constant dense<0.000000e+00> : vector<16x128xf32>
    %2 = tpu.matmul %0, %1, %cst {dimension_numbers = #tpu.dot_dimension_numbers<[1], [0], [0], [1], [0, 0, 1, 1], [], []>} : vector<16x128xf32>, vector<128x128xf32>, vector<16x128xf32> -> vector<16x128xf32>
    %c0_3 = arith.constant 0 : index
    %c0_4 = arith.constant 0 : index
    %3 = vector.load %arg3[%c0_3, %c0_4] : memref<1x128xf32, #tpu.memory_space<vmem>>, vector<1x128xf32>
    %4 = vector.broadcast %3 : vector<1x128xf32> to vector<16x128xf32>
    %5 = arith.addf %2, %4 : vector<16x128xf32>
    %cst_5 = arith.constant 0.000000e+00 : f32
    %6 = vector.broadcast %cst_5 : f32 to vector<16x128xf32>
    %7 = arith.maximumf %5, %6 : vector<16x128xf32>
    %c0_6 = arith.constant 0 : index
    %c0_7 = arith.constant 0 : index
    %8 = vector.load %arg4[%c0_6, %c0_7] : memref<128x128xf32, #tpu.memory_space<vmem>>, vector<128x128xf32>
    %cst_8 = arith.constant dense<0.000000e+00> : vector<16x128xf32>
    %9 = tpu.matmul %7, %8, %cst_8 {dimension_numbers = #tpu.dot_dimension_numbers<[1], [0], [0], [1], [0, 0, 1, 1], [], []>} : vector<16x128xf32>, vector<128x128xf32>, vector<16x128xf32> -> vector<16x128xf32>
    %c0_9 = arith.constant 0 : index
    %c0_10 = arith.constant 0 : index
    %10 = vector.load %arg5[%c0_9, %c0_10] : memref<1x128xf32, #tpu.memory_space<vmem>>, vector<1x128xf32>
    %11 = vector.broadcast %10 : vector<1x128xf32> to vector<16x128xf32>
    %12 = arith.addf %9, %11 : vector<16x128xf32>
    %cst_11 = arith.constant 0.000000e+00 : f32
    %13 = vector.broadcast %cst_11 : f32 to vector<16x128xf32>
    %14 = arith.maximumf %12, %13 : vector<16x128xf32>
    %c0_12 = arith.constant 0 : index
    %c0_13 = arith.constant 0 : index
    %15 = vector.load %arg6[%c0_12, %c0_13] : memref<128x128xf32, #tpu.memory_space<vmem>>, vector<128x128xf32>
    %cst_14 = arith.constant dense<0.000000e+00> : vector<16x128xf32>
    %16 = tpu.matmul %14, %15, %cst_14 {dimension_numbers = #tpu.dot_dimension_numbers<[1], [0], [0], [1], [0, 0, 1, 1], [], []>} : vector<16x128xf32>, vector<128x128xf32>, vector<16x128xf32> -> vector<16x128xf32>
    %c0_15 = arith.constant 0 : index
    %c0_16 = arith.constant 0 : index
    %17 = vector.load %arg7[%c0_15, %c0_16] : memref<1x128xf32, #tpu.memory_space<vmem>>, vector<1x128xf32>
    %18 = vector.broadcast %17 : vector<1x128xf32> to vector<16x128xf32>
    %19 = arith.addf %16, %18 : vector<16x128xf32>
    %cst_17 = arith.constant 0.000000e+00 : f32
    %20 = vector.broadcast %cst_17 : f32 to vector<16x128xf32>
    %21 = arith.maximumf %19, %20 : vector<16x128xf32>
    %c0_18 = arith.constant 0 : index
    %c0_19 = arith.constant 0 : index
    %22 = vector.load %arg8[%c0_18, %c0_19] : memref<128x128xf32, #tpu.memory_space<vmem>>, vector<128x128xf32>
    %cst_20 = arith.constant dense<0.000000e+00> : vector<16x128xf32>
    %23 = tpu.matmul %21, %22, %cst_20 {dimension_numbers = #tpu.dot_dimension_numbers<[1], [0], [0], [1], [0, 0, 1, 1], [], []>} : vector<16x128xf32>, vector<128x128xf32>, vector<16x128xf32> -> vector<16x128xf32>
    %c0_21 = arith.constant 0 : index
    %c0_22 = arith.constant 0 : index
    %24 = vector.load %arg9[%c0_21, %c0_22] : memref<1x128xf32, #tpu.memory_space<vmem>>, vector<1x128xf32>
    %25 = vector.broadcast %24 : vector<1x128xf32> to vector<16x128xf32>
    %26 = arith.addf %23, %25 : vector<16x128xf32>
    %cst_23 = arith.constant 0.000000e+00 : f32
    %27 = vector.broadcast %cst_23 : f32 to vector<16x128xf32>
    %28 = arith.maximumf %26, %27 : vector<16x128xf32>
    %c0_24 = arith.constant 0 : index
    %c0_25 = arith.constant 0 : index
    %29 = vector.load %arg10[%c0_24, %c0_25] : memref<128x128xf32, #tpu.memory_space<vmem>>, vector<128x128xf32>
    %cst_26 = arith.constant dense<0.000000e+00> : vector<16x128xf32>
    %30 = tpu.matmul %28, %29, %cst_26 {dimension_numbers = #tpu.dot_dimension_numbers<[1], [0], [0], [1], [0, 0, 1, 1], [], []>} : vector<16x128xf32>, vector<128x128xf32>, vector<16x128xf32> -> vector<16x128xf32>
    %c0_27 = arith.constant 0 : index
    %c0_28 = arith.constant 0 : index
    %31 = vector.load %arg11[%c0_27, %c0_28] : memref<1x128xf32, #tpu.memory_space<vmem>>, vector<1x128xf32>
    %32 = vector.broadcast %31 : vector<1x128xf32> to vector<16x128xf32>
    %33 = arith.addf %30, %32 : vector<16x128xf32>
    %cst_29 = arith.constant 0.000000e+00 : f32
    %34 = vector.broadcast %cst_29 : f32 to vector<16x128xf32>
    %35 = arith.maximumf %33, %34 : vector<16x128xf32>
    %c0_30 = arith.constant 0 : index
    %c0_31 = arith.constant 0 : index
    %36 = vector.load %arg12[%c0_30, %c0_31] : memref<128x128xf32, #tpu.memory_space<vmem>>, vector<128x128xf32>
    %cst_32 = arith.constant dense<0.000000e+00> : vector<16x128xf32>
    %37 = tpu.matmul %35, %36, %cst_32 {dimension_numbers = #tpu.dot_dimension_numbers<[1], [0], [0], [1], [0, 0, 1, 1], [], []>} : vector<16x128xf32>, vector<128x128xf32>, vector<16x128xf32> -> vector<16x128xf32>
    %c0_33 = arith.constant 0 : index
    %c0_34 = arith.constant 0 : index
    %38 = vector.load %arg13[%c0_33, %c0_34] : memref<1x128xf32, #tpu.memory_space<vmem>>, vector<1x128xf32>
    %39 = vector.broadcast %38 : vector<1x128xf32> to vector<16x128xf32>
    %40 = arith.addf %37, %39 : vector<16x128xf32>
    %cst_35 = arith.constant 0.000000e+00 : f32
    %41 = vector.broadcast %cst_35 : f32 to vector<16x128xf32>
    %42 = arith.maximumf %40, %41 : vector<16x128xf32>
    %c0_36 = arith.constant 0 : index
    %c0_37 = arith.constant 0 : index
    %43 = vector.load %arg14[%c0_36, %c0_37] : memref<128x128xf32, #tpu.memory_space<vmem>>, vector<128x128xf32>
    %cst_38 = arith.constant dense<0.000000e+00> : vector<16x128xf32>
    %44 = tpu.matmul %42, %43, %cst_38 {dimension_numbers = #tpu.dot_dimension_numbers<[1], [0], [0], [1], [0, 0, 1, 1], [], []>} : vector<16x128xf32>, vector<128x128xf32>, vector<16x128xf32> -> vector<16x128xf32>
    %c0_39 = arith.constant 0 : index
    %c0_40 = arith.constant 0 : index
    %45 = vector.load %arg15[%c0_39, %c0_40] : memref<1x128xf32, #tpu.memory_space<vmem>>, vector<1x128xf32>
    %46 = vector.broadcast %45 : vector<1x128xf32> to vector<16x128xf32>
    %47 = arith.addf %44, %46 : vector<16x128xf32>
    %c0_41 = arith.constant 0 : index
    %c0_42 = arith.constant 0 : index
    %48 = vector.load %arg16[%c0_41, %c0_42] : memref<16x128xf32, #tpu.memory_space<vmem>>, vector<16x128xf32>
    tpu.vector_store %arg16[%c0_41, %c0_42], %47 {strides = array<i32>} : memref<16x128xf32, #tpu.memory_space<vmem>>, vector<16x128xf32>,
    return
  }
  func.func @transform_0(%arg0: i32) -> (i32, i32) {
    %c0_i32 = arith.constant 0 : i32
    %c0_i32_0 = arith.constant 0 : i32
    return %arg0, %c0_i32 : i32, i32
  }
  func.func @transform_1(%arg0: i32) -> (i32, i32) {
    %c0_i32 = arith.constant 0 : i32
    %c0_i32_0 = arith.constant 0 : i32
    %c0_i32_1 = arith.constant 0 : i32
    return %c0_i32, %c0_i32_0 : i32, i32
  }
  func.func @transform_2(%arg0: i32) -> (i32, i32) {
    %c0_i32 = arith.constant 0 : i32
    %c0_i32_0 = arith.constant 0 : i32
    %c0_i32_1 = arith.constant 0 : i32
    return %c0_i32, %c0_i32_0 : i32, i32
  }
  func.func @transform_3(%arg0: i32) -> (i32, i32) {
    %c0_i32 = arith.constant 0 : i32
    %c0_i32_0 = arith.constant 0 : i32
    %c0_i32_1 = arith.constant 0 : i32
    return %c0_i32, %c0_i32_0 : i32, i32
  }
  func.func @transform_4(%arg0: i32) -> (i32, i32) {
    %c0_i32 = arith.constant 0 : i32
    %c0_i32_0 = arith.constant 0 : i32
    %c0_i32_1 = arith.constant 0 : i32
    return %c0_i32, %c0_i32_0 : i32, i32
  }
  func.func @transform_5(%arg0: i32) -> (i32, i32) {
    %c0_i32 = arith.constant 0 : i32
    %c0_i32_0 = arith.constant 0 : i32
    %c0_i32_1 = arith.constant 0 : i32
    return %c0_i32, %c0_i32_0 : i32, i32
  }
  func.func @transform_6(%arg0: i32) -> (i32, i32) {
    %c0_i32 = arith.constant 0 : i32
    %c0_i32_0 = arith.constant 0 : i32
    %c0_i32_1 = arith.constant 0 : i32
    return %c0_i32, %c0_i32_0 : i32, i32
  }
  func.func @transform_7(%arg0: i32) -> (i32, i32) {
    %c0_i32 = arith.constant 0 : i32
    %c0_i32_0 = arith.constant 0 : i32
    %c0_i32_1 = arith.constant 0 : i32
    return %c0_i32, %c0_i32_0 : i32, i32
  }
  func.func @transform_8(%arg0: i32) -> (i32, i32) {
    %c0_i32 = arith.constant 0 : i32
    %c0_i32_0 = arith.constant 0 : i32
    %c0_i32_1 = arith.constant 0 : i32
    return %c0_i32, %c0_i32_0 : i32, i32
  }
  func.func @transform_9(%arg0: i32) -> (i32, i32) {
    %c0_i32 = arith.constant 0 : i32
    %c0_i32_0 = arith.constant 0 : i32
    %c0_i32_1 = arith.constant 0 : i32
    return %c0_i32, %c0_i32_0 : i32, i32
  }
  func.func @transform_10(%arg0: i32) -> (i32, i32) {
    %c0_i32 = arith.constant 0 : i32
    %c0_i32_0 = arith.constant 0 : i32
    %c0_i32_1 = arith.constant 0 : i32
    return %c0_i32, %c0_i32_0 : i32, i32
  }
  func.func @transform_11(%arg0: i32) -> (i32, i32) {
    %c0_i32 = arith.constant 0 : i32
    %c0_i32_0 = arith.constant 0 : i32
    %c0_i32_1 = arith.constant 0 : i32
    return %c0_i32, %c0_i32_0 : i32, i32
  }
  func.func @transform_12(%arg0: i32) -> (i32, i32) {
    %c0_i32 = arith.constant 0 : i32
    %c0_i32_0 = arith.constant 0 : i32
    %c0_i32_1 = arith.constant 0 : i32
    return %c0_i32, %c0_i32_0 : i32, i32
  }
  func.func @transform_13(%arg0: i32) -> (i32, i32) {
    %c0_i32 = arith.constant 0 : i32
    %c0_i32_0 = arith.constant 0 : i32
    %c0_i32_1 = arith.constant 0 : i32
    return %c0_i32, %c0_i32_0 : i32, i32
  }
  func.func @transform_14(%arg0: i32) -> (i32, i32) {
    %c0_i32 = arith.constant 0 : i32
    %c0_i32_0 = arith.constant 0 : i32
    %c0_i32_1 = arith.constant 0 : i32
    return %c0_i32, %c0_i32_0 : i32, i32
  }
  func.func @transform_15(%arg0: i32) -> (i32, i32) {
    %c0_i32 = arith.constant 0 : i32
    %c0_i32_0 = arith.constant 0 : i32
    return %arg0, %c0_i32 : i32, i32
  }
}

</mosaic_0001>

<llo_original>
// kernel: tpu_custom_call.1
$region0: #{tpu_custom_call.1}
  #allocation0 [shape = 'u32[]', space=smem, size = 0x4, offset = 0x4, fixed_abs, tag = 'smem constant byte address 0x4 - core index']
  #allocation1 [shape = 'u32[72,128]{1,0:T(1,128)}', space=vmem, size = 0x9000, scoped, tag = 'internal scratch']
  %s0 = inlined_call_operand.hbm [shape: f32[16,128], index: 0, kind: input, shape index: {}]
  %s1 = inlined_call_operand.hbm [shape: f32[128,128], index: 1, kind: input, shape index: {}]
  %s2 = inlined_call_operand.vmem [shape: f32[1,128], index: 2, kind: input, shape index: {}]
  %s3 = inlined_call_operand.hbm [shape: f32[128,128], index: 3, kind: input, shape index: {}]
  %s4 = inlined_call_operand.vmem [shape: f32[1,128], index: 4, kind: input, shape index: {}]
  %s5 = inlined_call_operand.hbm [shape: f32[128,128], index: 5, kind: input, shape index: {}]
  %s6 = inlined_call_operand.vmem [shape: f32[1,128], index: 6, kind: input, shape index: {}]
  %s7 = inlined_call_operand.hbm [shape: f32[128,128], index: 7, kind: input, shape index: {}]
  %s8 = inlined_call_operand.vmem [shape: f32[1,128], index: 8, kind: input, shape index: {}]
  %s9 = inlined_call_operand.hbm [shape: f32[128,128], index: 9, kind: input, shape index: {}]
  %s10 = inlined_call_operand.vmem [shape: f32[1,128], index: 10, kind: input, shape index: {}]
  %s11 = inlined_call_operand.hbm [shape: f32[128,128], index: 11, kind: input, shape index: {}]
  %s12 = inlined_call_operand.vmem [shape: f32[1,128], index: 12, kind: input, shape index: {}]
  %s13 = inlined_call_operand.hbm [shape: f32[128,128], index: 13, kind: input, shape index: {}]
  %s14 = inlined_call_operand.vmem [shape: f32[1,128], index: 14, kind: input, shape index: {}]
  %s15 = inlined_call_operand.hbm [shape: f32[16,128], index: 15, kind: output, shape index: {}]
  %s16 = sld [smem:[#allocation0]]
  $region102: #{tpu_custom_call.1} parent=0
    _
  %s18 = ssub.s32 1, %s16
  %s19 = scalar_select 0, %s18, %s16
  $region1: #{tpu_custom_call.1} parent=0
    #allocation2 [shape = 'u8[8192]{0}', space=vmem, size = 0x2000, scoped, tag = 'input window, operand 0, single buffered']
    #allocation3 [shape = 's32[1]{0}', space=sflag, size = 0x4, scoped, tag = 'scoped memory for tpu_custom_call.1']
    #allocation4 [shape = 's32[1]{0}', space=sflag, size = 0x4, scoped, tag = 'scoped memory for tpu_custom_call.1']
    #allocation5 [shape = 'u8[65536]{0}', space=vmem, size = 0x10000, scoped, tag = 'input window, operand 1, single buffered']
    #allocation6 [shape = 's32[1]{0}', space=sflag, size = 0x4, scoped, tag = 'scoped memory for tpu_custom_call.1']
    #allocation7 [shape = 'u8[65536]{0}', space=vmem, size = 0x10000, scoped, tag = 'input window, operand 3, single buffered']
    #allocation8 [shape = 'u8[65536]{0}', space=vmem, size = 0x10000, scoped, tag = 'input window, operand 5, single buffered']
    #allocation9 [shape = 's32[1]{0}', space=sflag, size = 0x4, scoped, tag = 'scoped memory for tpu_custom_call.1']
    #allocation10 [shape = 'u8[65536]{0}', space=vmem, size = 0x10000, scoped, tag = 'input window, operand 7, single buffered']
    #allocation11 [shape = 'u8[65536]{0}', space=vmem, size = 0x10000, scoped, tag = 'input window, operand 9, single buffered']
    #allocation12 [shape = 's32[1]{0}', space=sflag, size = 0x4, scoped, tag = 'scoped memory for tpu_custom_call.1']
    #allocation13 [shape = 'u8[65536]{0}', space=vmem, size = 0x10000, scoped, tag = 'input window, operand 11, single buffered']
    #allocation14 [shape = 'u8[65536]{0}', space=vmem, size = 0x10000, scoped, tag = 'input window, operand 13, single buffered']
    #allocation15 [shape = 's32[1]{0}', space=sflag, size = 0x4, scoped, tag = 'scoped memory for tpu_custom_call.1']
    #allocation16 [shape = 'u8[8192]{0}', space=vmem, size = 0x2000, scoped, tag = 'output window, operand 0, single buffered']
    %20 = vsyncpa [#allocation3], 0
    %21 = vsyncpa [#allocation6], 0
    %22 = vsyncpa [#allocation9], 0
    %23 = vsyncpa [#allocation12], 0
    %24 = vsyncpa [#allocation15], 0
    %25 = vsyncpa [#allocation4], 0
    // Predicated region
    $region2: #{tpu_custom_call.1} parent=1 // pred_check
      _
    $region3: #{tpu_custom_call.1} parent=1 // pred_check_branch
      %27 = sbr.rel (0) target = $region5
    $region4: #{tpu_custom_call.1} parent=1 // pred_region
      %29 = vsyncadd [#allocation3], 0
      %s30 = sshll.u32 %s0, 4
      %s31 = int_to_ptr.hbm [resolvable:$true] %s30
      %s32 = sshll.u32 [#allocation2], 4
      %s33 = int_to_ptr.vmem [resolvable:$true] %s32
      %38 = dma.hbm_to_vmem [thread:$0]  %s31, 256, %s33, [#allocation3], 128, 128, 8
    $region5: #{tpu_custom_call.1} parent=1 // pred_fallthru
      _
    // Predicated region
    $region6: #{tpu_custom_call.1} parent=1 // pred_check
      _
    $region7: #{tpu_custom_call.1} parent=1 // pred_check_branch
      %40 = sbr.rel (0) target = $region9
    $region8: #{tpu_custom_call.1} parent=1 // pred_region
      %42 = vsyncadd [#allocation6], 0
      %s43 = sshll.u32 %s1, 4
      %s44 = int_to_ptr.hbm [resolvable:$true] %s43
      %s45 = sshll.u32 [#allocation5], 4
      %s46 = int_to_ptr.vmem [resolvable:$true] %s45
      %51 = dma.hbm_to_vmem [thread:$0]  %s44, 2048, %s46, [#allocation6], 128, 128, 8
    $region9: #{tpu_custom_call.1} parent=1 // pred_fallthru
      _
    // Predicated region
    $region10: #{tpu_custom_call.1} parent=1 // pred_check
      _
    $region11: #{tpu_custom_call.1} parent=1 // pred_check_branch
      %53 = sbr.rel (0) target = $region13
    $region12: #{tpu_custom_call.1} parent=1 // pred_region
      _
    $region13: #{tpu_custom_call.1} parent=1 // pred_fallthru
      _
    // Predicated region
    $region14: #{tpu_custom_call.1} parent=1 // pred_check
      _
    $region15: #{tpu_custom_call.1} parent=1 // pred_check_branch
      %55 = sbr.rel (0) target = $region17
    $region16: #{tpu_custom_call.1} parent=1 // pred_region
      %57 = vsyncadd [#allocation6], 0
      %s58 = sshll.u32 %s3, 4
      %s59 = int_to_ptr.hbm [resolvable:$true] %s58
      %s60 = sshll.u32 [#allocation7], 4
      %s61 = int_to_ptr.vmem [resolvable:$true] %s60
      %66 = dma.hbm_to_vmem [thread:$0]  %s59, 2048, %s61, [#allocation6], 128, 128, 8
    $region17: #{tpu_custom_call.1} parent=1 // pred_fallthru
      _
    // Predicated region
    $region18: #{tpu_custom_call.1} parent=1 // pred_check
      _
    $region19: #{tpu_custom_call.1} parent=1 // pred_check_branch
      %68 = sbr.rel (0) target = $region21
    $region20: #{tpu_custom_call.1} parent=1 // pred_region
      _
    $region21: #{tpu_custom_call.1} parent=1 // pred_fallthru
      _
    // Predicated region
    $region22: #{tpu_custom_call.1} parent=1 // pred_check
      _
    $region23: #{tpu_custom_call.1} parent=1 // pred_check_branch
      %70 = sbr.rel (0) target = $region25
    $region24: #{tpu_custom_call.1} parent=1 // pred_region
      %72 = vsyncadd [#allocation9], 0
      %s73 = sshll.u32 %s5, 4
      %s74 = int_to_ptr.hbm [resolvable:$true] %s73
      %s75 = sshll.u32 [#allocation8], 4
      %s76 = int_to_ptr.vmem [resolvable:$true] %s75
      %81 = dma.hbm_to_vmem [thread:$0]  %s74, 2048, %s76, [#allocation9], 128, 128, 8
    $region25: #{tpu_custom_call.1} parent=1 // pred_fallthru
      _
    // Predicated region
    $region26: #{tpu_custom_call.1} parent=1 // pred_check
      _
    $region27: #{tpu_custom_call.1} parent=1 // pred_check_branch
      %83 = sbr.rel (0) target = $region29
    $region28: #{tpu_custom_call.1} parent=1 // pred_region
      _
    $region29: #{tpu_custom_call.1} parent=1 // pred_fallthru
      _
    // Predicated region
    $region30: #{tpu_custom_call.1} parent=1 // pred_check
      _
    $region31: #{tpu_custom_call.1} parent=1 // pred_check_branch
      %85 = sbr.rel (0) target = $region33
    $region32: #{tpu_custom_call.1} parent=1 // pred_region
      %87 = vsyncadd [#allocation9], 0
      %s88 = sshll.u32 %s7, 4
      %s89 = int_to_ptr.hbm [resolvable:$true] %s88
      %s90 = sshll.u32 [#allocation10], 4
      %s91 = int_to_ptr.vmem [resolvable:$true] %s90
      %96 = dma.hbm_to_vmem [thread:$0]  %s89, 2048, %s91, [#allocation9], 128, 128, 8
    $region33: #{tpu_custom_call.1} parent=1 // pred_fallthru
      _
    // Predicated region
    $region34: #{tpu_custom_call.1} parent=1 // pred_check
      _
    $region35: #{tpu_custom_call.1} parent=1 // pred_check_branch
      %98 = sbr.rel (0) target = $region37
    $region36: #{tpu_custom_call.1} parent=1 // pred_region
      _
    $region37: #{tpu_custom_call.1} parent=1 // pred_fallthru
      _
    // Predicated region
    $region38: #{tpu_custom_call.1} parent=1 // pred_check
      _
    $region39: #{tpu_custom_call.1} parent=1 // pred_check_branch
      %100 = sbr.rel (0) target = $region41
    $region40: #{tpu_custom_call.1} parent=1 // pred_region
      %102 = vsyncadd [#allocation12], 0
      %s103 = sshll.u32 %s9, 4
      %s104 = int_to_ptr.hbm [resolvable:$true] %s103
      %s105 = sshll.u32 [#allocation11], 4
      %s106 = int_to_ptr.vmem [resolvable:$true] %s105
      %111 = dma.hbm_to_vmem [thread:$0]  %s104, 2048, %s106, [#allocation12], 128, 128, 8
    $region41: #{tpu_custom_call.1} parent=1 // pred_fallthru
      _
    // Predicated region
    $region42: #{tpu_custom_call.1} parent=1 // pred_check
      _
    $region43: #{tpu_custom_call.1} parent=1 // pred_check_branch
      %113 = sbr.rel (0) target = $region45
    $region44: #{tpu_custom_call.1} parent=1 // pred_region
      _
    $region45: #{tpu_custom_call.1} parent=1 // pred_fallthru
      _
    // Predicated region
    $region46: #{tpu_custom_call.1} parent=1 // pred_check
      _
    $region47: #{tpu_custom_call.1} parent=1 // pred_check_branch
      %115 = sbr.rel (0) target = $region49
    $region48: #{tpu_custom_call.1} parent=1 // pred_region
      %117 = vsyncadd [#allocation12], 0
      %s118 = sshll.u32 %s11, 4
      %s119 = int_to_ptr.hbm [resolvable:$true] %s118
      %s120 = sshll.u32 [#allocation13], 4
      %s121 = int_to_ptr.vmem [resolvable:$true] %s120
      %126 = dma.hbm_to_vmem [thread:$0]  %s119, 2048, %s121, [#allocation12], 128, 128, 8
    $region49: #{tpu_custom_call.1} parent=1 // pred_fallthru
      _
    // Predicated region
    $region50: #{tpu_custom_call.1} parent=1 // pred_check
      _
    $region51: #{tpu_custom_call.1} parent=1 // pred_check_branch
      %128 = sbr.rel (0) target = $region53
    $region52: #{tpu_custom_call.1} parent=1 // pred_region
      _
    $region53: #{tpu_custom_call.1} parent=1 // pred_fallthru
      _
    // Predicated region
    $region54: #{tpu_custom_call.1} parent=1 // pred_check
      _
    $region55: #{tpu_custom_call.1} parent=1 // pred_check_branch
      %130 = sbr.rel (0) target = $region57
    $region56: #{tpu_custom_call.1} parent=1 // pred_region
      %132 = vsyncadd [#allocation15], 0
      %s133 = sshll.u32 %s13, 4
      %s134 = int_to_ptr.hbm [resolvable:$true] %s133
      %s135 = sshll.u32 [#allocation14], 4
      %s136 = int_to_ptr.vmem [resolvable:$true] %s135
      %141 = dma.hbm_to_vmem [thread:$0]  %s134, 2048, %s136, [#allocation15], 128, 128, 8
    $region57: #{tpu_custom_call.1} parent=1 // pred_fallthru
      _
    // Predicated region
    $region58: #{tpu_custom_call.1} parent=1 // pred_check
      _
    $region59: #{tpu_custom_call.1} parent=1 // pred_check_branch
      %143 = sbr.rel (0) target = $region61
    $region60: #{tpu_custom_call.1} parent=1 // pred_region
      _
    $region61: #{tpu_custom_call.1} parent=1 // pred_fallthru
      _
    // Predicated region
    $region62: #{tpu_custom_call.1} parent=1 // pred_check
      _
    $region63: #{tpu_custom_call.1} parent=1 // pred_check_branch
      %145 = sbr.rel (0) target = $region65
    $region64: #{tpu_custom_call.1} parent=1 // pred_region
      %147 = dma.done [#allocation3], 256
    $region65: #{tpu_custom_call.1} parent=1 // pred_fallthru
      _
    // Predicated region
    $region66: #{tpu_custom_call.1} parent=1 // pred_check
      _
    $region67: #{tpu_custom_call.1} parent=1 // pred_check_branch
      %149 = sbr.rel (0) target = $region69
    $region68: #{tpu_custom_call.1} parent=1 // pred_region
      %151 = dma.done [#allocation6], 2048
    $region69: #{tpu_custom_call.1} parent=1 // pred_fallthru
      _
    // Predicated region
    $region70: #{tpu_custom_call.1} parent=1 // pred_check
      _
    $region71: #{tpu_custom_call.1} parent=1 // pred_check_branch
      %153 = sbr.rel (0) target = $region73
    $region72: #{tpu_custom_call.1} parent=1 // pred_region
      %155 = dma.done [#allocation6], 2048
    $region73: #{tpu_custom_call.1} parent=1 // pred_fallthru
      _
    // Predicated region
    $region74: #{tpu_custom_call.1} parent=1 // pred_check
      _
    $region75: #{tpu_custom_call.1} parent=1 // pred_check_branch
      %157 = sbr.rel (0) target = $region77
    $region76: #{tpu_custom_call.1} parent=1 // pred_region
      %159 = dma.done [#allocation9], 2048
    $region77: #{tpu_custom_call.1} parent=1 // pred_fallthru
      _
    // Predicated region
    $region78: #{tpu_custom_call.1} parent=1 // pred_check
      _
    $region79: #{tpu_custom_call.1} parent=1 // pred_check_branch
      %161 = sbr.rel (0) target = $region81
    $region80: #{tpu_custom_call.1} parent=1 // pred_region
      %163 = dma.done [#allocation9], 2048
    $region81: #{tpu_custom_call.1} parent=1 // pred_fallthru
      _
    // Predicated region
    $region82: #{tpu_custom_call.1} parent=1 // pred_check
      _
    $region83: #{tpu_custom_call.1} parent=1 // pred_check_branch
      %165 = sbr.rel (0) target = $region85
    $region84: #{tpu_custom_call.1} parent=1 // pred_region
      %167 = dma.done [#allocation12], 2048
    $region85: #{tpu_custom_call.1} parent=1 // pred_fallthru
      _
    // Predicated region
    $region86: #{tpu_custom_call.1} parent=1 // pred_check
      _
    $region87: #{tpu_custom_call.1} parent=1 // pred_check_branch
      %169 = sbr.rel (0) target = $region89
    $region88: #{tpu_custom_call.1} parent=1 // pred_region
      %171 = dma.done [#allocation12], 2048
    $region89: #{tpu_custom_call.1} parent=1 // pred_fallthru
      _
    // Predicated region
    $region90: #{tpu_custom_call.1} parent=1 // pred_check
      _
    $region91: #{tpu_custom_call.1} parent=1 // pred_check_branch
      %173 = sbr.rel (0) target = $region93
    $region92: #{tpu_custom_call.1} parent=1 // pred_region
      %175 = dma.done [#allocation15], 2048
    $region93: #{tpu_custom_call.1} parent=1 // pred_fallthru
      _
    %v176 = vld [vmem:[#allocation2] sm:$0xff]
    %v177 = vld [vmem:[#allocation2 + $0x8] sm:$0xff]
    %v178 = vld [vmem:[#allocation5] sm:$0xff]
    %v179 = vld [vmem:[#allocation5 + $0x8] sm:$0xff]
    %v180 = vld [vmem:[#allocation5 + $0x10] sm:$0xff]
    %v181 = vld [vmem:[#allocation5 + $0x18] sm:$0xff]
    %v182 = vld [vmem:[#allocation5 + $0x20] sm:$0xff]
    %v183 = vld [vmem:[#allocation5 + $0x28] sm:$0xff]
    %v184 = vld [vmem:[#allocation5 + $0x30] sm:$0xff]
    %v185 = vld [vmem:[#allocation5 + $0x38] sm:$0xff]
    %v186 = vld [vmem:[#allocation5 + $0x40] sm:$0xff]
    %v187 = vld [vmem:[#allocation5 + $0x48] sm:$0xff]
    %v188 = vld [vmem:[#allocation5 + $0x50] sm:$0xff]
    %v189 = vld [vmem:[#allocation5 + $0x58] sm:$0xff]
    %v190 = vld [vmem:[#allocation5 + $0x60] sm:$0xff]
    %v191 = vld [vmem:[#allocation5 + $0x68] sm:$0xff]
    %v192 = vld [vmem:[#allocation5 + $0x70] sm:$0xff]
    %v193 = vld [vmem:[#allocation5 + $0x78] sm:$0xff]
    %v194 = vld [vmem:[%s2] sm:$0x1]
    %v196 = vperm.slane %v194, 0
    %198 = vmatpush.msra.mxu0 %v193
    %199 = vmatpush.msra.mxu0 %v192
    %200 = vmatpush.msra.mxu0 %v191
    %201 = vmatpush.msra.mxu0 %v190
    %202 = vmatpush.msra.mxu0 %v189
    %203 = vmatpush.msra.mxu0 %v188
    %204 = vmatpush.msra.mxu0 %v187
    %205 = vmatpush.msra.mxu0 %v186
    %206 = vmatpush.msra.mxu0 %v185
    %207 = vmatpush.msra.mxu0 %v184
    %208 = vmatpush.msra.mxu0 %v183
    %209 = vmatpush.msra.mxu0 %v182
    %210 = vmatpush.msra.mxu0 %v181
    %211 = vmatpush.msra.mxu0 %v180
    %212 = vmatpush.msra.mxu0 %v179
    %213 = vmatpush.msra.mxu0 %v178
    %214 = vmatmul.f32.gmra.mxu0 %v176
    %v215 = vpop.f32.mrf.mxu0
    %v216 = vadd.f32 %v196, %v215
    %217 = vmatmul.f32.gmra.mxu0 %v177
    %v218 = vpop.f32.mrf.mxu0
    %v219 = vadd.f32 %v196, %v218
    %220 = vdwg.mxu0
    %v221 = vmax.f32 %v216, 0.0
    %v222 = vmax.f32 %v219, 0.0
    %v223 = vld [vmem:[#allocation7] sm:$0xff]
    %v224 = vld [vmem:[#allocation7 + $0x8] sm:$0xff]
    %v225 = vld [vmem:[#allocation7 + $0x10] sm:$0xff]
    %v226 = vld [vmem:[#allocation7 + $0x18] sm:$0xff]
    %v227 = vld [vmem:[#allocation7 + $0x20] sm:$0xff]
    %v228 = vld [vmem:[#allocation7 + $0x28] sm:$0xff]
    %v229 = vld [vmem:[#allocation7 + $0x30] sm:$0xff]
    %v230 = vld [vmem:[#allocation7 + $0x38] sm:$0xff]
    %v231 = vld [vmem:[#allocation7 + $0x40] sm:$0xff]
    %v232 = vld [vmem:[#allocation7 + $0x48] sm:$0xff]
    %v233 = vld [vmem:[#allocation7 + $0x50] sm:$0xff]
    %v234 = vld [vmem:[#allocation7 + $0x58] sm:$0xff]
    %v235 = vld [vmem:[#allocation7 + $0x60] sm:$0xff]
    %v236 = vld [vmem:[#allocation7 + $0x68] sm:$0xff]
    %v237 = vld [vmem:[#allocation7 + $0x70] sm:$0xff]
    %v238 = vld [vmem:[#allocation7 + $0x78] sm:$0xff]
    %v239 = vld [vmem:[%s4] sm:$0x1]
    %v241 = vperm.slane %v239, 0
    %243 = vmatpush.msra.mxu0 %v238
    %244 = vmatpush.msra.mxu0 %v237
    %245 = vmatpush.msra.mxu0 %v236
    %246 = vmatpush.msra.mxu0 %v235
    %247 = vmatpush.msra.mxu0 %v234
    %248 = vmatpush.msra.mxu0 %v233
    %249 = vmatpush.msra.mxu0 %v232
    %250 = vmatpush.msra.mxu0 %v231
    %251 = vmatpush.msra.mxu0 %v230
    %252 = vmatpush.msra.mxu0 %v229
    %253 = vmatpush.msra.mxu0 %v228
    %254 = vmatpush.msra.mxu0 %v227
    %255 = vmatpush.msra.mxu0 %v226
    %256 = vmatpush.msra.mxu0 %v225
    %257 = vmatpush.msra.mxu0 %v224
    %258 = vmatpush.msra.mxu0 %v223
    %259 = vmatmul.f32.gmra.mxu0 %v221
    %v260 = vpop.f32.mrf.mxu0
    %v261 = vadd.f32 %v241, %v260
    %262 = vmatmul.f32.gmra.mxu0 %v222
    %v263 = vpop.f32.mrf.mxu0
    %v264 = vadd.f32 %v241, %v263
    %265 = vdwg.mxu0
    %v266 = vmax.f32 %v261, 0.0
    %v267 = vmax.f32 %v264, 0.0
    %v268 = vld [vmem:[#allocation8] sm:$0xff]
    %v269 = vld [vmem:[#allocation8 + $0x8] sm:$0xff]
    %v270 = vld [vmem:[#allocation8 + $0x10] sm:$0xff]
    %v271 = vld [vmem:[#allocation8 + $0x18] sm:$0xff]
    %v272 = vld [vmem:[#allocation8 + $0x20] sm:$0xff]
    %v273 = vld [vmem:[#allocation8 + $0x28] sm:$0xff]
    %v274 = vld [vmem:[#allocation8 + $0x30] sm:$0xff]
    %v275 = vld [vmem:[#allocation8 + $0x38] sm:$0xff]
    %v276 = vld [vmem:[#allocation8 + $0x40] sm:$0xff]
    %v277 = vld [vmem:[#allocation8 + $0x48] sm:$0xff]
    %v278 = vld [vmem:[#allocation8 + $0x50] sm:$0xff]
    %v279 = vld [vmem:[#allocation8 + $0x58] sm:$0xff]
    %v280 = vld [vmem:[#allocation8 + $0x60] sm:$0xff]
    %v281 = vld [vmem:[#allocation8 + $0x68] sm:$0xff]
    %v282 = vld [vmem:[#allocation8 + $0x70] sm:$0xff]
    %v283 = vld [vmem:[#allocation8 + $0x78] sm:$0xff]
    %v284 = vld [vmem:[%s6] sm:$0x1]
    %v286 = vperm.slane %v284, 0
    %288 = vmatpush.msra.mxu0 %v283
    %289 = vmatpush.msra.mxu0 %v282
    %290 = vmatpush.msra.mxu0 %v281
    %291 = vmatpush.msra.mxu0 %v280
    %292 = vmatpush.msra.mxu0 %v279
    %293 = vmatpush.msra.mxu0 %v278
    %294 = vmatpush.msra.mxu0 %v277
    %295 = vmatpush.msra.mxu0 %v276
    %296 = vmatpush.msra.mxu0 %v275
    %297 = vmatpush.msra.mxu0 %v274
    %298 = vmatpush.msra.mxu0 %v273
    %299 = vmatpush.msra.mxu0 %v272
    %300 = vmatpush.msra.mxu0 %v271
    %301 = vmatpush.msra.mxu0 %v270
    %302 = vmatpush.msra.mxu0 %v269
    %303 = vmatpush.msra.mxu0 %v268
    %304 = vmatmul.f32.gmra.mxu0 %v266
    %v305 = vpop.f32.mrf.mxu0
    %v306 = vadd.f32 %v286, %v305
    %307 = vmatmul.f32.gmra.mxu0 %v267
    %v308 = vpop.f32.mrf.mxu0
    %v309 = vadd.f32 %v286, %v308
    %310 = vdwg.mxu0
    %v311 = vmax.f32 %v306, 0.0
    %v312 = vmax.f32 %v309, 0.0
    %v313 = vld [vmem:[#allocation10] sm:$0xff]
    %v314 = vld [vmem:[#allocation10 + $0x8] sm:$0xff]
    %v315 = vld [vmem:[#allocation10 + $0x10] sm:$0xff]
    %v316 = vld [vmem:[#allocation10 + $0x18] sm:$0xff]
    %v317 = vld [vmem:[#allocation10 + $0x20] sm:$0xff]
    %v318 = vld [vmem:[#allocation10 + $0x28] sm:$0xff]
    %v319 = vld [vmem:[#allocation10 + $0x30] sm:$0xff]
    %v320 = vld [vmem:[#allocation10 + $0x38] sm:$0xff]
    %v321 = vld [vmem:[#allocation10 + $0x40] sm:$0xff]
    %v322 = vld [vmem:[#allocation10 + $0x48] sm:$0xff]
    %v323 = vld [vmem:[#allocation10 + $0x50] sm:$0xff]
    %v324 = vld [vmem:[#allocation10 + $0x58] sm:$0xff]
    %v325 = vld [vmem:[#allocation10 + $0x60] sm:$0xff]
    %v326 = vld [vmem:[#allocation10 + $0x68] sm:$0xff]
    %v327 = vld [vmem:[#allocation10 + $0x70] sm:$0xff]
    %v328 = vld [vmem:[#allocation10 + $0x78] sm:$0xff]
    %v329 = vld [vmem:[%s8] sm:$0x1]
    %v331 = vperm.slane %v329, 0
    %333 = vmatpush.msra.mxu0 %v328
    %334 = vmatpush.msra.mxu0 %v327
    %335 = vmatpush.msra.mxu0 %v326
    %336 = vmatpush.msra.mxu0 %v325
    %337 = vmatpush.msra.mxu0 %v324
    %338 = vmatpush.msra.mxu0 %v323
    %339 = vmatpush.msra.mxu0 %v322
    %340 = vmatpush.msra.mxu0 %v321
    %341 = vmatpush.msra.mxu0 %v320
    %342 = vmatpush.msra.mxu0 %v319
    %343 = vmatpush.msra.mxu0 %v318
    %344 = vmatpush.msra.mxu0 %v317
    %345 = vmatpush.msra.mxu0 %v316
    %346 = vmatpush.msra.mxu0 %v315
    %347 = vmatpush.msra.mxu0 %v314
    %348 = vmatpush.msra.mxu0 %v313
    %349 = vmatmul.f32.gmra.mxu0 %v311
    %v350 = vpop.f32.mrf.mxu0
    %v351 = vadd.f32 %v331, %v350
    %352 = vmatmul.f32.gmra.mxu0 %v312
    %v353 = vpop.f32.mrf.mxu0
    %v354 = vadd.f32 %v331, %v353
    %355 = vdwg.mxu0
    %v356 = vmax.f32 %v351, 0.0
    %v357 = vmax.f32 %v354, 0.0
    %v358 = vld [vmem:[#allocation11] sm:$0xff]
    %v359 = vld [vmem:[#allocation11 + $0x8] sm:$0xff]
    %v360 = vld [vmem:[#allocation11 + $0x10] sm:$0xff]
    %v361 = vld [vmem:[#allocation11 + $0x18] sm:$0xff]
    %v362 = vld [vmem:[#allocation11 + $0x20] sm:$0xff]
    %v363 = vld [vmem:[#allocation11 + $0x28] sm:$0xff]
    %v364 = vld [vmem:[#allocation11 + $0x30] sm:$0xff]
    %v365 = vld [vmem:[#allocation11 + $0x38] sm:$0xff]
    %v366 = vld [vmem:[#allocation11 + $0x40] sm:$0xff]
    %v367 = vld [vmem:[#allocation11 + $0x48] sm:$0xff]
    %v368 = vld [vmem:[#allocation11 + $0x50] sm:$0xff]
    %v369 = vld [vmem:[#allocation11 + $0x58] sm:$0xff]
    %v370 = vld [vmem:[#allocation11 + $0x60] sm:$0xff]
    %v371 = vld [vmem:[#allocation11 + $0x68] sm:$0xff]
    %v372 = vld [vmem:[#allocation11 + $0x70] sm:$0xff]
    %v373 = vld [vmem:[#allocation11 + $0x78] sm:$0xff]
    %v374 = vld [vmem:[%s10] sm:$0x1]
    %v376 = vperm.slane %v374, 0
    %378 = vmatpush.msra.mxu0 %v373
    %379 = vmatpush.msra.mxu0 %v372
    %380 = vmatpush.msra.mxu0 %v371
    %381 = vmatpush.msra.mxu0 %v370
    %382 = vmatpush.msra.mxu0 %v369
    %383 = vmatpush.msra.mxu0 %v368
    %384 = vmatpush.msra.mxu0 %v367
    %385 = vmatpush.msra.mxu0 %v366
    %386 = vmatpush.msra.mxu0 %v365
    %387 = vmatpush.msra.mxu0 %v364
    %388 = vmatpush.msra.mxu0 %v363
    %389 = vmatpush.msra.mxu0 %v362
    %390 = vmatpush.msra.mxu0 %v361
    %391 = vmatpush.msra.mxu0 %v360
    %392 = vmatpush.msra.mxu0 %v359
    %393 = vmatpush.msra.mxu0 %v358
    %394 = vmatmul.f32.gmra.mxu0 %v356
    %v395 = vpop.f32.mrf.mxu0
    %v396 = vadd.f32 %v376, %v395
    %397 = vmatmul.f32.gmra.mxu0 %v357
    %v398 = vpop.f32.mrf.mxu0
    %v399 = vadd.f32 %v376, %v398
    %400 = vdwg.mxu0
    %v401 = vmax.f32 %v396, 0.0
    %v402 = vmax.f32 %v399, 0.0
    %v403 = vld [vmem:[#allocation13] sm:$0xff]
    %v404 = vld [vmem:[#allocation13 + $0x8] sm:$0xff]
    %v405 = vld [vmem:[#allocation13 + $0x10] sm:$0xff]
    %v406 = vld [vmem:[#allocation13 + $0x18] sm:$0xff]
    %v407 = vld [vmem:[#allocation13 + $0x20] sm:$0xff]
    %v408 = vld [vmem:[#allocation13 + $0x28] sm:$0xff]
    %v409 = vld [vmem:[#allocation13 + $0x30] sm:$0xff]
    %v410 = vld [vmem:[#allocation13 + $0x38] sm:$0xff]
    %v411 = vld [vmem:[#allocation13 + $0x40] sm:$0xff]
    %v412 = vld [vmem:[#allocation13 + $0x48] sm:$0xff]
    %v413 = vld [vmem:[#allocation13 + $0x50] sm:$0xff]
    %v414 = vld [vmem:[#allocation13 + $0x58] sm:$0xff]
    %v415 = vld [vmem:[#allocation13 + $0x60] sm:$0xff]
    %v416 = vld [vmem:[#allocation13 + $0x68] sm:$0xff]
    %v417 = vld [vmem:[#allocation13 + $0x70] sm:$0xff]
    %v418 = vld [vmem:[#allocation13 + $0x78] sm:$0xff]
    %v419 = vld [vmem:[%s12] sm:$0x1]
    %v421 = vperm.slane %v419, 0
    %423 = vmatpush.msra.mxu0 %v418
    %424 = vmatpush.msra.mxu0 %v417
    %425 = vmatpush.msra.mxu0 %v416
    %426 = vmatpush.msra.mxu0 %v415
    %427 = vmatpush.msra.mxu0 %v414
    %428 = vmatpush.msra.mxu0 %v413
    %429 = vmatpush.msra.mxu0 %v412
    %430 = vmatpush.msra.mxu0 %v411
    %431 = vmatpush.msra.mxu0 %v410
    %432 = vmatpush.msra.mxu0 %v409
    %433 = vmatpush.msra.mxu0 %v408
    %434 = vmatpush.msra.mxu0 %v407
    %435 = vmatpush.msra.mxu0 %v406
    %436 = vmatpush.msra.mxu0 %v405
    %437 = vmatpush.msra.mxu0 %v404
    %438 = vmatpush.msra.mxu0 %v403
    %439 = vmatmul.f32.gmra.mxu0 %v401
    %v440 = vpop.f32.mrf.mxu0
    %v441 = vadd.f32 %v421, %v440
    %442 = vmatmul.f32.gmra.mxu0 %v402
    %v443 = vpop.f32.mrf.mxu0
    %v444 = vadd.f32 %v421, %v443
    %445 = vdwg.mxu0
    %v446 = vmax.f32 %v441, 0.0
    %v447 = vmax.f32 %v444, 0.0
    %v448 = vld [vmem:[#allocation14] sm:$0xff]
    %v449 = vld [vmem:[#allocation14 + $0x8] sm:$0xff]
    %v450 = vld [vmem:[#allocation14 + $0x10] sm:$0xff]
    %v451 = vld [vmem:[#allocation14 + $0x18] sm:$0xff]
    %v452 = vld [vmem:[#allocation14 + $0x20] sm:$0xff]
    %v453 = vld [vmem:[#allocation14 + $0x28] sm:$0xff]
    %v454 = vld [vmem:[#allocation14 + $0x30] sm:$0xff]
    %v455 = vld [vmem:[#allocation14 + $0x38] sm:$0xff]
    %v456 = vld [vmem:[#allocation14 + $0x40] sm:$0xff]
    %v457 = vld [vmem:[#allocation14 + $0x48] sm:$0xff]
    %v458 = vld [vmem:[#allocation14 + $0x50] sm:$0xff]
    %v459 = vld [vmem:[#allocation14 + $0x58] sm:$0xff]
    %v460 = vld [vmem:[#allocation14 + $0x60] sm:$0xff]
    %v461 = vld [vmem:[#allocation14 + $0x68] sm:$0xff]
    %v462 = vld [vmem:[#allocation14 + $0x70] sm:$0xff]
    %v463 = vld [vmem:[#allocation14 + $0x78] sm:$0xff]
    %v464 = vld [vmem:[%s14] sm:$0x1]
    %v466 = vperm.slane %v464, 0
    %468 = vmatpush.msra.mxu0 %v463
    %469 = vmatpush.msra.mxu0 %v462
    %470 = vmatpush.msra.mxu0 %v461
    %471 = vmatpush.msra.mxu0 %v460
    %472 = vmatpush.msra.mxu0 %v459
    %473 = vmatpush.msra.mxu0 %v458
    %474 = vmatpush.msra.mxu0 %v457
    %475 = vmatpush.msra.mxu0 %v456
    %476 = vmatpush.msra.mxu0 %v455
    %477 = vmatpush.msra.mxu0 %v454
    %478 = vmatpush.msra.mxu0 %v453
    %479 = vmatpush.msra.mxu0 %v452
    %480 = vmatpush.msra.mxu0 %v451
    %481 = vmatpush.msra.mxu0 %v450
    %482 = vmatpush.msra.mxu0 %v449
    %483 = vmatpush.msra.mxu0 %v448
    %484 = vmatmul.f32.gmra.mxu0 %v446
    %v485 = vpop.f32.mrf.mxu0
    %v486 = vadd.f32 %v466, %v485
    %487 = vmatmul.f32.gmra.mxu0 %v447
    %v488 = vpop.f32.mrf.mxu0
    %v489 = vadd.f32 %v466, %v488
    %490 = vdwg.mxu0
    %491 = vst [vmem:[#allocation16] sm:$0xff] %v486
    %492 = vst [vmem:[#allocation16 + $0x8] sm:$0xff] %v489
    // Predicated region
    $region94: #{tpu_custom_call.1} parent=1 // pred_check
      _
    $region95: #{tpu_custom_call.1} parent=1 // pred_check_branch
      %494 = sbr.rel (0) target = $region97
    $region96: #{tpu_custom_call.1} parent=1 // pred_region
      %496 = vsyncadd [#allocation4], 0
      %s497 = sshll.u32 [#allocation16], 4
      %s498 = int_to_ptr.vmem [resolvable:$true] %s497
      %s499 = sshll.u32 %s15, 4
      %s500 = int_to_ptr.hbm [resolvable:$true] %s499
      %505 = dma.vmem_to_hbm [thread:$0]  %s498, 256, %s500, [#allocation4], 128, 128, 8
    $region97: #{tpu_custom_call.1} parent=1 // pred_fallthru
      _
    // Predicated region
    $region98: #{tpu_custom_call.1} parent=1 // pred_check
      _
    $region99: #{tpu_custom_call.1} parent=1 // pred_check_branch
      %507 = sbr.rel (0) target = $region101
    $region100: #{tpu_custom_call.1} parent=1 // pred_region
      %509 = dma.done [#allocation4], 256
    $region101: #{tpu_custom_call.1} parent=1 // pred_fallthru
      _
    %510 = vsyncpa [#allocation3], 1
    %511 = vsyncpa [#allocation6], 1
    %512 = vsyncpa [#allocation9], 1
    %513 = vsyncpa [#allocation12], 1
    %514 = vsyncpa [#allocation15], 1
    %515 = vsyncpa [#allocation4], 1

</llo_original>
